<compile_context>
chip_gen: v7x
topology: tpu7x:2x2x1
jax: 0.10.0
libtpu: 0.0.40
codegen_flags: <defaults>
</compile_context>

<pallas_src>
import functools

import jax
import jax.numpy as jnp
from jax.experimental import pallas as pl
from jax.experimental.pallas import tpu as pltpu


def _round_up(x: int, m: int) -> int:
    return ((x + m - 1) // m) * m


def _tpu_generation() -> int:
    try:
        kind = jax.devices()[0].device_kind.lower()
    except Exception:
        return 0
    for g in (7, 6, 5, 4):
        if f"v{g}" in kind:
            return g
    return 0


def _gen_limits(gen: int):
    """(max batch tile, max K tile, VMEM budget bytes) per TPU generation."""
    if gen >= 7:   # v7x: 64 MiB VMEM/TC but ~2.3x HBM BW -> moderate TB
        return 512, 8192, 56 << 20
    if gen == 6:   # v6e: 128 MiB VMEM, W1-bandwidth bound -> large TB pays off
        return 768, 8192, 96 << 20
    if gen == 5:   # v5e: compute/BW balanced around TB ~ 256
        return 256, 8192, 64 << 20
    return 256, 4096, 48 << 20


def _picker_kernel(x_ref, w1_ref, b1_ref, w2_ref, b2_ref, w3_ref, b3_ref,
                   mask_ref, o_ref, h1_acc):
    """Grid = (batch tiles, K tiles); K (reduction over F) is the last axis."""
    k = pl.program_id(1)

    # fc1 partial product: (TB, tk) @ (tk, 512) with f32 accumulation.
    partial = jnp.dot(x_ref[...].astype(jnp.bfloat16), w1_ref[...],
                      preferred_element_type=jnp.float32)

    @pl.when(k == 0)
    def _first():
        h1_acc[...] = partial           # direct write: no zero-init + reload

    @pl.when(k > 0)
    def _accumulate():
        h1_acc[...] += partial

    @pl.when(k == pl.num_programs(1) - 1)
    def _finalize():
        # fc1 bias + ReLU (f32 epilogue), then fc2 / fc3 on the MXU in bf16.
        h1 = jnp.maximum(h1_acc[...] + b1_ref[...], 0.0)
        h2 = jnp.dot(h1.astype(w2_ref.dtype), w2_ref[...],
                     preferred_element_type=jnp.float32)
        h2 = jnp.maximum(h2 + b2_ref[...], 0.0)
        z = jnp.dot(h2.astype(w3_ref.dtype), w3_ref[...],
                    preferred_element_type=jnp.float32) + b3_ref[...]
        # Selective sigmoid folded arithmetically: m=1 -> sigmoid(z), m=0 -> z.
        o_ref[...] = z + mask_ref[...] * (jax.nn.sigmoid(z) - z)


def prepare_picker_params(params):
    """One-time weight pad/cast (hoisted out of the per-call path)."""
    gen = _tpu_generation()
    tb_max, tk_max, vmem_cap = _gen_limits(gen)

    w1, b1, w2, b2, w3, b3 = params
    F, H1 = w1.shape
    H2 = w2.shape[1]
    out_dim = w3.shape[1]

    # K tile: multiple of 256 that divides F_pad (common case: no x padding).
    F_pad = _round_up(F, 256)
    tk = min(tk_max, F_pad)
    while F_pad % tk != 0:
        tk -= 256
    out_pad = _round_up(out_dim, 128)            # lane-dense output slab

    bf = jnp.bfloat16
    w1p = jnp.zeros((F_pad, H1), bf).at[:F, :].set(w1.astype(bf))
    w2b = w2.astype(bf)
    w3p = jnp.zeros((H2, out_pad), bf).at[:, :out_dim].set(w3.astype(bf))
    b1f = b1.reshape(1, H1).astype(jnp.float32)
    b2f = b2.reshape(1, H2).astype(jnp.float32)
    b3p = jnp.zeros((1, out_pad), jnp.float32).at[:, :out_dim].set(
        b3.reshape(1, out_dim).astype(jnp.float32))

    # Selective-sigmoid mask: flat column j gets sigmoid iff (j % 6) < 4
    # (i.e. the x, y, width, height fields of each particle).
    cols = jnp.arange(out_pad)
    mask = (((cols % 6) < 4) & (cols < out_dim)).astype(jnp.float32)[None, :]

    arrays = jax.device_put((w1p, b1f, w2b, b2f, w3p, b3p, mask))
    static = dict(gen=gen, tb_max=tb_max, tk=tk, vmem_cap=vmem_cap,
                  F=F, F_pad=F_pad, H1=H1, H2=H2,
                  out_dim=out_dim, out_pad=out_pad)
    return arrays, static


def particle_picker_forward(x, prep_arrays, *, include_class_token,
                            only_use_class_token, gen, tb_max, tk, vmem_cap,
                            F, F_pad, H1, H2, out_dim, out_pad):
    """x: (B, num_patch_embeddings + 1, latent_dim) float32."""
    w1p, b1f, w2b, b2f, w3p, b3p, mask = prep_arrays

    # TODO(synk): the cls-token drop / flatten stays as a wrapper-side
    # slice+reshape; fusing it into the x BlockSpec is possible but is minor
    # next to W1 streaming.
    if only_use_class_token:
        x_flat = x[:, 0, :]
    elif include_class_token:
        x_flat = x.reshape(x.shape[0], -1)
    else:
        x_flat = x[:, 1:, :].reshape(x.shape[0], -1)
    B = x_flat.shape[0]
    assert x_flat.shape[1] == F, (x_flat.shape, F)

    # ---- batch tile selection (per-generation, VMEM-budget aware) ----------
    TB = min(tb_max, _round_up(max(B, 1), 16))
    if gen >= 7 and B > 16:
        # Keep >= 2 batch tiles so both v7x TensorCores get work.
        TB = min(TB, _round_up((B + 1) // 2, 16))

    def _vmem_est(tb):
        x_db = 2 * tb * tk * 4                      # f32 x tile, double-buffered
        w1_db = 2 * tk * H1 * 2                     # bf16 W1 tile, double-buffered
        resident = 2 * (H1 * H2 * 2 + H2 * out_pad * 2
                        + (H1 + H2 + 2 * out_pad) * 4)
        out_db = 2 * tb * out_pad * 4
        scratch = tb * H1 * 4
        return x_db + w1_db + resident + out_db + scratch

    while _vmem_est(TB) > vmem_cap - (8 << 20) and TB > 16:
        TB = max(16, _round_up(TB // 2, 16))

    B_pad = _round_up(B, TB)
    num_b = B_pad // TB
    num_k = F_pad // tk

    x_flat = x_flat.astype(jnp.float32)
    if B_pad != B or F_pad != F:
        x_flat = jnp.pad(x_flat, ((0, B_pad - B), (0, F_pad - F)))

    out_flat = pl.pallas_call(
        _picker_kernel,
        out_shape=jax.ShapeDtypeStruct((B_pad, out_pad), jnp.float32),
        grid=(num_b, num_k),
        in_specs=[
            pl.BlockSpec((TB, tk), lambda i, k: (i, k)),        # x tile (f32)
            pl.BlockSpec((tk, H1), lambda i, k: (k, 0)),        # W1 tile (bf16)
            pl.BlockSpec((1, H1), lambda i, k: (0, 0)),         # b1 (resident)
            pl.BlockSpec((H1, H2), lambda i, k: (0, 0)),        # W2 (resident)
            pl.BlockSpec((1, H2), lambda i, k: (0, 0)),         # b2 (resident)
            pl.BlockSpec((H2, out_pad), lambda i, k: (0, 0)),   # W3 (resident)
            pl.BlockSpec((1, out_pad), lambda i, k: (0, 0)),    # b3 (resident)
            pl.BlockSpec((1, out_pad), lambda i, k: (0, 0)),    # sigmoid mask
        ],
        out_specs=pl.BlockSpec((TB, out_pad), lambda i, k: (i, 0)),
        scratch_shapes=[pltpu.VMEM((TB, H1), jnp.float32)],     # fc1 accumulator
        compiler_params=pltpu.CompilerParams(
            dimension_semantics=("parallel", "arbitrary"),
            vmem_limit_bytes=vmem_cap,
        ),
    )(x_flat, w1p, b1f, w2b, b2f, w3p, b3p, mask)

    # Drop batch / lane padding, reshape to (B, num_particles, 6).
    num_particles = out_dim // 6
    return out_flat[:B, :out_dim].reshape(B, num_particles, 6)


def init_params(key, initial_input_size, num_particles):
    """Deterministic synthetic params. Weights stored as (in, out), f32."""
    ks = jax.random.split(key, 6)

    def lin(kw, kb, fan_in, fan_out):
        bound = 1.0 / jnp.sqrt(fan_in)
        w = jax.random.uniform(kw, (fan_in, fan_out), jnp.float32, -bound, bound)
        b = jax.random.uniform(kb, (1, fan_out), jnp.float32, -bound, bound)
        return w, b

    w1, b1 = lin(ks[0], ks[1], initial_input_size, 512)
    w2, b2 = lin(ks[2], ks[3], 512, 256)
    w3, b3 = lin(ks[4], ks[5], 256, num_particles * 6)
    return (w1, b1, w2, b2, w3, b3)


if __name__ == "__main__":
    # Small config consistent with the module.
    latent_dim = 32
    num_patch_embeddings = 8
    num_particles = 8
    include_class_token = False
    only_use_class_token = False
    batch = 2

    if only_use_class_token:
        initial_input_size = latent_dim
    elif include_class_token:
        initial_input_size = latent_dim * (num_patch_embeddings + 1)
    else:
        initial_input_size = latent_dim * num_patch_embeddings

    key = jax.random.PRNGKey(0)
    kx, kp = jax.random.split(key)
    x = jax.random.normal(kx, (batch, num_patch_embeddings + 1, latent_dim),
                          dtype=jnp.float32)
    params = init_params(kp, initial_input_size, num_particles)

    # One-time weight preparation (padding / bf16 cast hoisted out of forward).
    prep_arrays, static_cfg = prepare_picker_params(params)

    fwd = jax.jit(functools.partial(
        particle_picker_forward,
        include_class_token=include_class_token,
        only_use_class_token=only_use_class_token,
        **static_cfg))

    out = fwd(x, prep_arrays)
    jax.block_until_ready(out)

    # Reference in plain JAX with matching bf16-input / f32-accumulate numerics.
    # NOTE: bf16 MXU inputs are an accepted numerics decision vs. the f32
    # PyTorch module (~1e-2 relative drift from true f32).
    x_flat = x[:, 1:, :].reshape(batch, -1)
    w1, b1, w2, b2, w3, b3 = params
    bf = jnp.bfloat16
    h = jnp.maximum(
        jnp.dot(x_flat.astype(bf), w1.astype(bf),
                preferred_element_type=jnp.float32) + b1, 0.0)
    h = jnp.maximum(
        jnp.dot(h.astype(bf), w2.astype(bf),
                preferred_element_type=jnp.float32) + b2, 0.0)
    z = (jnp.dot(h.astype(bf), w3.astype(bf),
                 preferred_element_type=jnp.float32) + b3
         ).reshape(batch, num_particles, 6)
    ref = jnp.concatenate([jax.nn.sigmoid(z[:, :, :4]), z[:, :, 4:]], axis=-1)

    assert out.shape == (batch, num_particles, 6)
    err = float(jnp.max(jnp.abs(out - ref)))
    assert jnp.allclose(out, ref, atol=2e-3, rtol=2e-3), err

    print("KERNEL_OK")
</pallas_src>

<mosaic_0001>
module attributes {stable_mosaic.version = 11 : i64} {
  func.func @_picker_kernel(%arg0: i32, %arg1: i32, %arg2: memref<16x256xf32, #tpu.memory_space<vmem>>, %arg3: memref<256x512xbf16, #tpu.memory_space<vmem>>, %arg4: memref<1x512xf32, #tpu.memory_space<vmem>>, %arg5: memref<512x256xbf16, #tpu.memory_space<vmem>>, %arg6: memref<1x256xf32, #tpu.memory_space<vmem>>, %arg7: memref<256x128xbf16, #tpu.memory_space<vmem>>, %arg8: memref<1x128xf32, #tpu.memory_space<vmem>>, %arg9: memref<1x128xf32, #tpu.memory_space<vmem>>, %arg10: memref<16x128xf32, #tpu.memory_space<vmem>>, %arg11: memref<16x512xf32, #tpu.memory_space<vmem>>) attributes {dimension_semantics = [#tpu.dimension_semantics<parallel>, #tpu.dimension_semantics<arbitrary>], iteration_bounds = array<i64: 1, 1>, scalar_prefetch = 0 : i64, scratch_operands = 1 : i64, tpu.core_type = #tpu.core_type<tc>, window_params = [{transform_indices = @transform_0, window_bounds = array<i64: 16, 256>}, {transform_indices = @transform_1, window_bounds = array<i64: 256, 512>}, {pipeline_mode = #tpu.pipeline_mode<synchronous>, transform_indices = @transform_2, window_bounds = array<i64: 1, 512>}, {pipeline_mode = #tpu.pipeline_mode<synchronous>, transform_indices = @transform_3, window_bounds = array<i64: 512, 256>}, {pipeline_mode = #tpu.pipeline_mode<synchronous>, transform_indices = @transform_4, window_bounds = array<i64: 1, 256>}, {pipeline_mode = #tpu.pipeline_mode<synchronous>, transform_indices = @transform_5, window_bounds = array<i64: 256, 128>}, {pipeline_mode = #tpu.pipeline_mode<synchronous>, transform_indices = @transform_6, window_bounds = array<i64: 1, 128>}, {pipeline_mode = #tpu.pipeline_mode<synchronous>, transform_indices = @transform_7, window_bounds = array<i64: 1, 128>}, {transform_indices = @transform_8, window_bounds = array<i64: 16, 128>}]} {
    %c0 = arith.constant 0 : index
    %c0_0 = arith.constant 0 : index
    %0 = vector.load %arg2[%c0, %c0_0] : memref<16x256xf32, #tpu.memory_space<vmem>>, vector<16x256xf32>
    %1 = arith.truncf %0 : vector<16x256xf32> to vector<16x256xbf16>
    %c0_1 = arith.constant 0 : index
    %c0_2 = arith.constant 0 : index
    %2 = vector.load %arg3[%c0_1, %c0_2] : memref<256x512xbf16, #tpu.memory_space<vmem>>, vector<256x512xbf16>
    %cst = arith.constant dense<0.000000e+00> : vector<16x512xf32>
    %3 = tpu.matmul %1, %2, %cst {dimension_numbers = #tpu.dot_dimension_numbers<[1], [0], [0], [1], [0, 0, 1, 1], [], []>} : vector<16x256xbf16>, vector<256x512xbf16>, vector<16x512xf32> -> vector<16x512xf32>
    %c0_i32 = arith.constant 0 : i32
    %4 = arith.cmpi eq, %arg1, %c0_i32 : i32
    %5 = arith.extui %4 : i1 to i32
    %c0_i32_3 = arith.constant 0 : i32
    %6 = arith.cmpi ne, %5, %c0_i32_3 : i32
    scf.if %6 {
      %c0_8 = arith.constant 0 : index
      %c0_9 = arith.constant 0 : index
      %13 = vector.load %arg11[%c0_8, %c0_9] : memref<16x512xf32, #tpu.memory_space<vmem>>, vector<16x512xf32>
      tpu.vector_store %arg11[%c0_8, %c0_9], %3 {strides = array<i32>} : memref<16x512xf32, #tpu.memory_space<vmem>>, vector<16x512xf32>,
    } else {
    }
    %c0_i32_4 = arith.constant 0 : i32
    %7 = arith.cmpi sgt, %arg1, %c0_i32_4 : i32
    %8 = arith.extui %7 : i1 to i32
    %c0_i32_5 = arith.constant 0 : i32
    %9 = arith.cmpi ne, %8, %c0_i32_5 : i32
    scf.if %9 {
      %c0_8 = arith.constant 0 : index
      %c0_9 = arith.constant 0 : index
      %13 = vector.load %arg11[%c0_8, %c0_9] : memref<16x512xf32, #tpu.memory_space<vmem>>, vector<16x512xf32>
      %14 = arith.addf %13, %3 : vector<16x512xf32>
      %c0_10 = arith.constant 0 : index
      %c0_11 = arith.constant 0 : index
      %15 = vector.load %arg11[%c0_10, %c0_11] : memref<16x512xf32, #tpu.memory_space<vmem>>, vector<16x512xf32>
      tpu.vector_store %arg11[%c0_10, %c0_11], %14 {strides = array<i32>} : memref<16x512xf32, #tpu.memory_space<vmem>>, vector<16x512xf32>,
    } else {
    }
    %c0_i32_6 = arith.constant 0 : i32
    %10 = arith.cmpi eq, %arg1, %c0_i32_6 : i32
    %11 = arith.extui %10 : i1 to i32
    %c0_i32_7 = arith.constant 0 : i32
    %12 = arith.cmpi ne, %11, %c0_i32_7 : i32
    scf.if %12 {
      %c0_8 = arith.constant 0 : index
      %c0_9 = arith.constant 0 : index
      %13 = vector.load %arg11[%c0_8, %c0_9] : memref<16x512xf32, #tpu.memory_space<vmem>>, vector<16x512xf32>
      %c0_10 = arith.constant 0 : index
      %c0_11 = arith.constant 0 : index
      %14 = vector.load %arg4[%c0_10, %c0_11] : memref<1x512xf32, #tpu.memory_space<vmem>>, vector<1x512xf32>
      %15 = vector.broadcast %14 : vector<1x512xf32> to vector<16x512xf32>
      %16 = arith.addf %13, %15 : vector<16x512xf32>
      %cst_12 = arith.constant 0.000000e+00 : f32
      %17 = vector.broadcast %cst_12 : f32 to vector<16x512xf32>
      %18 = arith.maximumf %16, %17 : vector<16x512xf32>
      %19 = arith.truncf %18 : vector<16x512xf32> to vector<16x512xbf16>
      %c0_13 = arith.constant 0 : index
      %c0_14 = arith.constant 0 : index
      %20 = vector.load %arg5[%c0_13, %c0_14] : memref<512x256xbf16, #tpu.memory_space<vmem>>, vector<512x256xbf16>
      %cst_15 = arith.constant dense<0.000000e+00> : vector<16x256xf32>
      %21 = tpu.matmul %19, %20, %cst_15 {dimension_numbers = #tpu.dot_dimension_numbers<[1], [0], [0], [1], [0, 0, 1, 1], [], []>} : vector<16x512xbf16>, vector<512x256xbf16>, vector<16x256xf32> -> vector<16x256xf32>
      %c0_16 = arith.constant 0 : index
      %c0_17 = arith.constant 0 : index
      %22 = vector.load %arg6[%c0_16, %c0_17] : memref<1x256xf32, #tpu.memory_space<vmem>>, vector<1x256xf32>
      %23 = vector.broadcast %22 : vector<1x256xf32> to vector<16x256xf32>
      %24 = arith.addf %21, %23 : vector<16x256xf32>
      %cst_18 = arith.constant 0.000000e+00 : f32
      %25 = vector.broadcast %cst_18 : f32 to vector<16x256xf32>
      %26 = arith.maximumf %24, %25 : vector<16x256xf32>
      %27 = arith.truncf %26 : vector<16x256xf32> to vector<16x256xbf16>
      %c0_19 = arith.constant 0 : index
      %c0_20 = arith.constant 0 : index
      %28 = vector.load %arg7[%c0_19, %c0_20] : memref<256x128xbf16, #tpu.memory_space<vmem>>, vector<256x128xbf16>
      %cst_21 = arith.constant dense<0.000000e+00> : vector<16x128xf32>
      %29 = tpu.matmul %27, %28, %cst_21 {dimension_numbers = #tpu.dot_dimension_numbers<[1], [0], [0], [1], [0, 0, 1, 1], [], []>} : vector<16x256xbf16>, vector<256x128xbf16>, vector<16x128xf32> -> vector<16x128xf32>
      %c0_22 = arith.constant 0 : index
      %c0_23 = arith.constant 0 : index
      %30 = vector.load %arg8[%c0_22, %c0_23] : memref<1x128xf32, #tpu.memory_space<vmem>>, vector<1x128xf32>
      %31 = vector.broadcast %30 : vector<1x128xf32> to vector<16x128xf32>
      %32 = arith.addf %29, %31 : vector<16x128xf32>
      %c0_24 = arith.constant 0 : index
      %c0_25 = arith.constant 0 : index
      %33 = vector.load %arg9[%c0_24, %c0_25] : memref<1x128xf32, #tpu.memory_space<vmem>>, vector<1x128xf32>
      %34 = arith.negf %32 : vector<16x128xf32>
      %35 = math.exp %34 : vector<16x128xf32>
      %cst_26 = arith.constant 1.000000e+00 : f32
      %36 = vector.broadcast %cst_26 : f32 to vector<16x128xf32>
      %37 = arith.addf %36, %35 : vector<16x128xf32>
      %38 = arith.divf %36, %37 : vector<16x128xf32>
      %39 = arith.subf %38, %32 : vector<16x128xf32>
      %40 = vector.broadcast %33 : vector<1x128xf32> to vector<16x128xf32>
      %41 = arith.mulf %40, %39 : vector<16x128xf32>
      %42 = arith.addf %32, %41 : vector<16x128xf32>
      %c0_27 = arith.constant 0 : index
      %c0_28 = arith.constant 0 : index
      %43 = vector.load %arg10[%c0_27, %c0_28] : memref<16x128xf32, #tpu.memory_space<vmem>>, vector<16x128xf32>
      tpu.vector_store %arg10[%c0_27, %c0_28], %42 {strides = array<i32>} : memref<16x128xf32, #tpu.memory_space<vmem>>, vector<16x128xf32>,
    } else {
    }
    return
  }
  func.func @transform_0(%arg0: i32, %arg1: i32) -> (i32, i32) {
    %c0_i32 = arith.constant 0 : i32
    return %arg0, %arg1 : i32, i32
  }
  func.func @transform_1(%arg0: i32, %arg1: i32) -> (i32, i32) {
    %c0_i32 = arith.constant 0 : i32
    %c0_i32_0 = arith.constant 0 : i32
    return %arg1, %c0_i32 : i32, i32
  }
  func.func @transform_2(%arg0: i32, %arg1: i32) -> (i32, i32) {
    %c0_i32 = arith.constant 0 : i32
    %c0_i32_0 = arith.constant 0 : i32
    %c0_i32_1 = arith.constant 0 : i32
    return %c0_i32, %c0_i32_0 : i32, i32
  }
  func.func @transform_3(%arg0: i32, %arg1: i32) -> (i32, i32) {
    %c0_i32 = arith.constant 0 : i32
    %c0_i32_0 = arith.constant 0 : i32
    %c0_i32_1 = arith.constant 0 : i32
    return %c0_i32, %c0_i32_0 : i32, i32
  }
  func.func @transform_4(%arg0: i32, %arg1: i32) -> (i32, i32) {
    %c0_i32 = arith.constant 0 : i32
    %c0_i32_0 = arith.constant 0 : i32
    %c0_i32_1 = arith.constant 0 : i32
    return %c0_i32, %c0_i32_0 : i32, i32
  }
  func.func @transform_5(%arg0: i32, %arg1: i32) -> (i32, i32) {
    %c0_i32 = arith.constant 0 : i32
    %c0_i32_0 = arith.constant 0 : i32
    %c0_i32_1 = arith.constant 0 : i32
    return %c0_i32, %c0_i32_0 : i32, i32
  }
  func.func @transform_6(%arg0: i32, %arg1: i32) -> (i32, i32) {
    %c0_i32 = arith.constant 0 : i32
    %c0_i32_0 = arith.constant 0 : i32
    %c0_i32_1 = arith.constant 0 : i32
    return %c0_i32, %c0_i32_0 : i32, i32
  }
  func.func @transform_7(%arg0: i32, %arg1: i32) -> (i32, i32) {
    %c0_i32 = arith.constant 0 : i32
    %c0_i32_0 = arith.constant 0 : i32
    %c0_i32_1 = arith.constant 0 : i32
    return %c0_i32, %c0_i32_0 : i32, i32
  }
  func.func @transform_8(%arg0: i32, %arg1: i32) -> (i32, i32) {
    %c0_i32 = arith.constant 0 : i32
    %c0_i32_0 = arith.constant 0 : i32
    return %arg0, %c0_i32 : i32, i32
  }
}

</mosaic_0001>

<llo_original>
// kernel: particle_picker_forward.1
$region0: #{particle_picker_forward.1}
  #allocation0 [shape = 'u32[]', space=smem, size = 0x4, offset = 0x4, fixed_abs, tag = 'smem constant byte address 0x4 - core index']
  #allocation1 [shape = 'u32[144,128]{1,0:T(1,128)}', space=vmem, size = 0x12000, scoped, tag = 'internal scratch']
  #allocation2 [shape = 'f32[16,512]{1,0:T(8,128)}', space=vmem, size = 0x8000, scoped, tag = 'scratch operand']
  %s0 = inlined_call_operand.vmem [shape: f32[16,256], index: 0, kind: input, shape index: {}]
  %s1 = inlined_call_operand.hbm [shape: bf16[256,512], index: 1, kind: input, shape index: {}]
  %s2 = inlined_call_operand.vmem [shape: f32[1,512], index: 2, kind: input, shape index: {}]
  %s3 = inlined_call_operand.hbm [shape: bf16[512,256], index: 3, kind: input, shape index: {}]
  %s4 = inlined_call_operand.vmem [shape: f32[1,256], index: 4, kind: input, shape index: {}]
  %s5 = inlined_call_operand.vmem [shape: bf16[256,128], index: 5, kind: input, shape index: {}]
  %s6 = inlined_call_operand.vmem [shape: f32[1,128], index: 6, kind: input, shape index: {}]
  %s7 = inlined_call_operand.vmem [shape: f32[1,128], index: 7, kind: input, shape index: {}]
  %s8 = inlined_call_operand.vmem [shape: f32[16,128], index: 8, kind: output, shape index: {}]
  %s9 = sld [smem:[#allocation0]]
  $region62: #{particle_picker_forward.1} parent=0
    _
  %s11 = ssub.s32 1, %s9
  %s12 = scalar_select 0, %s11, %s9
  $region1: #{particle_picker_forward.1} parent=0
    #allocation3 [shape = 'u8[262144]{0}', space=vmem, size = 0x40000, scoped, tag = 'input window, operand 1, single buffered']
    #allocation4 [shape = 's32[1]{0}', space=sflag, size = 0x4, scoped, tag = 'scoped memory for particle_picker_forward.1']
    #allocation5 [shape = 'u8[262144]{0}', space=vmem, size = 0x40000, scoped, tag = 'input window, operand 3, single buffered']
    #allocation6 [shape = 's32[1]{0}', space=sflag, size = 0x4, scoped, tag = 'scoped memory for particle_picker_forward.1']
    %13 = vsyncpa [#allocation4], 0
    %14 = vsyncpa [#allocation6], 0
    // Predicated region
    $region2: #{particle_picker_forward.1} parent=1 // pred_check
      _
    $region3: #{particle_picker_forward.1} parent=1 // pred_check_branch
      %16 = sbr.rel (0) target = $region5
    $region4: #{particle_picker_forward.1} parent=1 // pred_region
      _
    $region5: #{particle_picker_forward.1} parent=1 // pred_fallthru
      _
    // Predicated region
    $region6: #{particle_picker_forward.1} parent=1 // pred_check
      _
    $region7: #{particle_picker_forward.1} parent=1 // pred_check_branch
      %18 = sbr.rel (0) target = $region9
    $region8: #{particle_picker_forward.1} parent=1 // pred_region
      %s20 = ssub.s32 8192, 8192
      %21 = vsyncadd [#allocation4], %s20
      %s22 = sshll.u32 [#allocation3], 4
      %s23 = int_to_ptr.vmem [resolvable:$true] %s22
      %28 = dma.hbm_to_vmem [thread:$0]  %s1, 8192, %s23, [#allocation4], 256, 256, 16
    $region9: #{particle_picker_forward.1} parent=1 // pred_fallthru
      _
    // Predicated region
    $region10: #{particle_picker_forward.1} parent=1 // pred_check
      _
    $region11: #{particle_picker_forward.1} parent=1 // pred_check_branch
      %30 = sbr.rel (0) target = $region13
    $region12: #{particle_picker_forward.1} parent=1 // pred_region
      _
    $region13: #{particle_picker_forward.1} parent=1 // pred_fallthru
      _
    // Predicated region
    $region14: #{particle_picker_forward.1} parent=1 // pred_check
      _
    $region15: #{particle_picker_forward.1} parent=1 // pred_check_branch
      %32 = sbr.rel (0) target = $region17
    $region16: #{particle_picker_forward.1} parent=1 // pred_region
      %s34 = ssub.s32 8192, 8192
      %35 = vsyncadd [#allocation6], %s34
      %s36 = sshll.u32 [#allocation5], 4
      %s37 = int_to_ptr.vmem [resolvable:$true] %s36
      %42 = dma.hbm_to_vmem [thread:$0]  %s3, 8192, %s37, [#allocation6], 128, 128, 8
    $region17: #{particle_picker_forward.1} parent=1 // pred_fallthru
      _
    // Predicated region
    $region18: #{particle_picker_forward.1} parent=1 // pred_check
      _
    $region19: #{particle_picker_forward.1} parent=1 // pred_check_branch
      %44 = sbr.rel (0) target = $region21
    $region20: #{particle_picker_forward.1} parent=1 // pred_region
      _
    $region21: #{particle_picker_forward.1} parent=1 // pred_fallthru
      _
    // Predicated region
    $region22: #{particle_picker_forward.1} parent=1 // pred_check
      _
    $region23: #{particle_picker_forward.1} parent=1 // pred_check_branch
      %46 = sbr.rel (0) target = $region25
    $region24: #{particle_picker_forward.1} parent=1 // pred_region
      _
    $region25: #{particle_picker_forward.1} parent=1 // pred_fallthru
      _
    // Predicated region
    $region26: #{particle_picker_forward.1} parent=1 // pred_check
      _
    $region27: #{particle_picker_forward.1} parent=1 // pred_check_branch
      %48 = sbr.rel (0) target = $region29
    $region28: #{particle_picker_forward.1} parent=1 // pred_region
      _
    $region29: #{particle_picker_forward.1} parent=1 // pred_fallthru
      _
    // Predicated region
    $region30: #{particle_picker_forward.1} parent=1 // pred_check
      _
    $region31: #{particle_picker_forward.1} parent=1 // pred_check_branch
      %50 = sbr.rel (0) target = $region33
    $region32: #{particle_picker_forward.1} parent=1 // pred_region
      _
    $region33: #{particle_picker_forward.1} parent=1 // pred_fallthru
      _
    // Predicated region
    $region34: #{particle_picker_forward.1} parent=1 // pred_check
      _
    $region35: #{particle_picker_forward.1} parent=1 // pred_check_branch
      %52 = sbr.rel (0) target = $region37
    $region36: #{particle_picker_forward.1} parent=1 // pred_region
      %53 = dma.done [#allocation4], 8192
    $region37: #{particle_picker_forward.1} parent=1 // pred_fallthru
      _
    // Predicated region
    $region38: #{particle_picker_forward.1} parent=1 // pred_check
      _
    $region39: #{particle_picker_forward.1} parent=1 // pred_check_branch
      %55 = sbr.rel (0) target = $region41
    $region40: #{particle_picker_forward.1} parent=1 // pred_region
      %56 = dma.done [#allocation6], 8192
    $region41: #{particle_picker_forward.1} parent=1 // pred_fallthru
      _
    %v58 = vld [vmem:[%s0] sm:$0xff]
    %v59 = vld [vmem:[%s0 + $0x8] sm:$0xff]
    %v60 = vld [vmem:[%s0 + $0x10] sm:$0xff]
    %v61 = vld [vmem:[%s0 + $0x18] sm:$0xff]
    %v62 = vpack.c.bf16 %v60, %v58
    %v63 = vpack.c.bf16 %v61, %v59
    %v64 = vld [vmem:[#allocation3] sm:$0xff]
    %v65 = vld [vmem:[#allocation3 + $0x8] sm:$0xff]
    %v66 = vld [vmem:[#allocation3 + $0x10] sm:$0xff]
    %v67 = vld [vmem:[#allocation3 + $0x18] sm:$0xff]
    %v68 = vld [vmem:[#allocation3 + $0x20] sm:$0xff]
    %v69 = vld [vmem:[#allocation3 + $0x28] sm:$0xff]
    %v70 = vld [vmem:[#allocation3 + $0x30] sm:$0xff]
    %v71 = vld [vmem:[#allocation3 + $0x38] sm:$0xff]
    %v72 = vld [vmem:[#allocation3 + $0x40] sm:$0xff]
    %v73 = vld [vmem:[#allocation3 + $0x48] sm:$0xff]
    %v74 = vld [vmem:[#allocation3 + $0x50] sm:$0xff]
    %v75 = vld [vmem:[#allocation3 + $0x58] sm:$0xff]
    %v76 = vld [vmem:[#allocation3 + $0x60] sm:$0xff]
    %v77 = vld [vmem:[#allocation3 + $0x68] sm:$0xff]
    %v78 = vld [vmem:[#allocation3 + $0x70] sm:$0xff]
    %v79 = vld [vmem:[#allocation3 + $0x78] sm:$0xff]
    %v80 = vld [vmem:[#allocation3 + $0x80] sm:$0xff]
    %v81 = vld [vmem:[#allocation3 + $0x88] sm:$0xff]
    %v82 = vld [vmem:[#allocation3 + $0x90] sm:$0xff]
    %v83 = vld [vmem:[#allocation3 + $0x98] sm:$0xff]
    %v84 = vld [vmem:[#allocation3 + $0xa0] sm:$0xff]
    %v85 = vld [vmem:[#allocation3 + $0xa8] sm:$0xff]
    %v86 = vld [vmem:[#allocation3 + $0xb0] sm:$0xff]
    %v87 = vld [vmem:[#allocation3 + $0xb8] sm:$0xff]
    %v88 = vld [vmem:[#allocation3 + $0xc0] sm:$0xff]
    %v89 = vld [vmem:[#allocation3 + $0xc8] sm:$0xff]
    %v90 = vld [vmem:[#allocation3 + $0xd0] sm:$0xff]
    %v91 = vld [vmem:[#allocation3 + $0xd8] sm:$0xff]
    %v92 = vld [vmem:[#allocation3 + $0xe0] sm:$0xff]
    %v93 = vld [vmem:[#allocation3 + $0xe8] sm:$0xff]
    %v94 = vld [vmem:[#allocation3 + $0xf0] sm:$0xff]
    %v95 = vld [vmem:[#allocation3 + $0xf8] sm:$0xff]
    %v96 = vld [vmem:[#allocation3 + $0x100] sm:$0xff]
    %v97 = vld [vmem:[#allocation3 + $0x108] sm:$0xff]
    %v98 = vld [vmem:[#allocation3 + $0x110] sm:$0xff]
    %v99 = vld [vmem:[#allocation3 + $0x118] sm:$0xff]
    %v100 = vld [vmem:[#allocation3 + $0x120] sm:$0xff]
    %v101 = vld [vmem:[#allocation3 + $0x128] sm:$0xff]
    %v102 = vld [vmem:[#allocation3 + $0x130] sm:$0xff]
    %v103 = vld [vmem:[#allocation3 + $0x138] sm:$0xff]
    %v104 = vld [vmem:[#allocation3 + $0x140] sm:$0xff]
    %v105 = vld [vmem:[#allocation3 + $0x148] sm:$0xff]
    %v106 = vld [vmem:[#allocation3 + $0x150] sm:$0xff]
    %v107 = vld [vmem:[#allocation3 + $0x158] sm:$0xff]
    %v108 = vld [vmem:[#allocation3 + $0x160] sm:$0xff]
    %v109 = vld [vmem:[#allocation3 + $0x168] sm:$0xff]
    %v110 = vld [vmem:[#allocation3 + $0x170] sm:$0xff]
    %v111 = vld [vmem:[#allocation3 + $0x178] sm:$0xff]
    %v112 = vld [vmem:[#allocation3 + $0x180] sm:$0xff]
    %v113 = vld [vmem:[#allocation3 + $0x188] sm:$0xff]
    %v114 = vld [vmem:[#allocation3 + $0x190] sm:$0xff]
    %v115 = vld [vmem:[#allocation3 + $0x198] sm:$0xff]
    %v116 = vld [vmem:[#allocation3 + $0x1a0] sm:$0xff]
    %v117 = vld [vmem:[#allocation3 + $0x1a8] sm:$0xff]
    %v118 = vld [vmem:[#allocation3 + $0x1b0] sm:$0xff]
    %v119 = vld [vmem:[#allocation3 + $0x1b8] sm:$0xff]
    %v120 = vld [vmem:[#allocation3 + $0x1c0] sm:$0xff]
    %v121 = vld [vmem:[#allocation3 + $0x1c8] sm:$0xff]
    %v122 = vld [vmem:[#allocation3 + $0x1d0] sm:$0xff]
    %v123 = vld [vmem:[#allocation3 + $0x1d8] sm:$0xff]
    %v124 = vld [vmem:[#allocation3 + $0x1e0] sm:$0xff]
    %v125 = vld [vmem:[#allocation3 + $0x1e8] sm:$0xff]
    %v126 = vld [vmem:[#allocation3 + $0x1f0] sm:$0xff]
    %v127 = vld [vmem:[#allocation3 + $0x1f8] sm:$0xff]
    %v192 = vunpack.c.l.b16 %v64
    %v193 = vunpack.c.h.b16 %v64
    %v194 = vunpack.c.l.b16 %v65
    %v195 = vunpack.c.h.b16 %v65
    %v196 = vunpack.c.l.b16 %v66
    %v197 = vunpack.c.h.b16 %v66
    %v198 = vunpack.c.l.b16 %v67
    %v199 = vunpack.c.h.b16 %v67
    %v200 = vunpack.c.l.b16 %v68
    %v201 = vunpack.c.h.b16 %v68
    %v202 = vunpack.c.l.b16 %v69
    %v203 = vunpack.c.h.b16 %v69
    %v204 = vunpack.c.l.b16 %v70
    %v205 = vunpack.c.h.b16 %v70
    %v206 = vunpack.c.l.b16 %v71
    %v207 = vunpack.c.h.b16 %v71
    %v208 = vunpack.c.l.b16 %v72
    %v209 = vunpack.c.h.b16 %v72
    %v210 = vunpack.c.l.b16 %v73
    %v211 = vunpack.c.h.b16 %v73
    %v212 = vunpack.c.l.b16 %v74
    %v213 = vunpack.c.h.b16 %v74
    %v214 = vunpack.c.l.b16 %v75
    %v215 = vunpack.c.h.b16 %v75
    %v216 = vunpack.c.l.b16 %v76
    %v217 = vunpack.c.h.b16 %v76
    %v218 = vunpack.c.l.b16 %v77
    %v219 = vunpack.c.h.b16 %v77
    %v220 = vunpack.c.l.b16 %v78
    %v221 = vunpack.c.h.b16 %v78
    %v222 = vunpack.c.l.b16 %v79
    %v223 = vunpack.c.h.b16 %v79
    %v224 = vunpack.c.l.b16 %v80
    %v225 = vunpack.c.h.b16 %v80
    %v226 = vunpack.c.l.b16 %v81
    %v227 = vunpack.c.h.b16 %v81
    %v228 = vunpack.c.l.b16 %v82
    %v229 = vunpack.c.h.b16 %v82
    %v230 = vunpack.c.l.b16 %v83
    %v231 = vunpack.c.h.b16 %v83
    %v232 = vunpack.c.l.b16 %v84
    %v233 = vunpack.c.h.b16 %v84
    %v234 = vunpack.c.l.b16 %v85
    %v235 = vunpack.c.h.b16 %v85
    %v236 = vunpack.c.l.b16 %v86
    %v237 = vunpack.c.h.b16 %v86
    %v238 = vunpack.c.l.b16 %v87
    %v239 = vunpack.c.h.b16 %v87
    %v240 = vunpack.c.l.b16 %v88
    %v241 = vunpack.c.h.b16 %v88
    %v242 = vunpack.c.l.b16 %v89
    %v243 = vunpack.c.h.b16 %v89
    %v244 = vunpack.c.l.b16 %v90
    %v245 = vunpack.c.h.b16 %v90
    %v246 = vunpack.c.l.b16 %v91
    %v247 = vunpack.c.h.b16 %v91
    %v248 = vunpack.c.l.b16 %v92
    %v249 = vunpack.c.h.b16 %v92
    %v250 = vunpack.c.l.b16 %v93
    %v251 = vunpack.c.h.b16 %v93
    %v252 = vunpack.c.l.b16 %v94
    %v253 = vunpack.c.h.b16 %v94
    %v254 = vunpack.c.l.b16 %v95
    %v255 = vunpack.c.h.b16 %v95
    %v256 = vunpack.c.l.b16 %v96
    %v257 = vunpack.c.h.b16 %v96
    %v258 = vunpack.c.l.b16 %v97
    %v259 = vunpack.c.h.b16 %v97
    %v260 = vunpack.c.l.b16 %v98
    %v261 = vunpack.c.h.b16 %v98
    %v262 = vunpack.c.l.b16 %v99
    %v263 = vunpack.c.h.b16 %v99
    %v264 = vunpack.c.l.b16 %v100
    %v265 = vunpack.c.h.b16 %v100
    %v266 = vunpack.c.l.b16 %v101
    %v267 = vunpack.c.h.b16 %v101
    %v268 = vunpack.c.l.b16 %v102
    %v269 = vunpack.c.h.b16 %v102
    %v270 = vunpack.c.l.b16 %v103
    %v271 = vunpack.c.h.b16 %v103
    %v272 = vunpack.c.l.b16 %v104
    %v273 = vunpack.c.h.b16 %v104
    %v274 = vunpack.c.l.b16 %v105
    %v275 = vunpack.c.h.b16 %v105
    %v276 = vunpack.c.l.b16 %v106
    %v277 = vunpack.c.h.b16 %v106
    %v278 = vunpack.c.l.b16 %v107
    %v279 = vunpack.c.h.b16 %v107
    %v280 = vunpack.c.l.b16 %v108
    %v281 = vunpack.c.h.b16 %v108
    %v282 = vunpack.c.l.b16 %v109
    %v283 = vunpack.c.h.b16 %v109
    %v284 = vunpack.c.l.b16 %v110
    %v285 = vunpack.c.h.b16 %v110
    %v286 = vunpack.c.l.b16 %v111
    %v287 = vunpack.c.h.b16 %v111
    %v288 = vunpack.c.l.b16 %v112
    %v289 = vunpack.c.h.b16 %v112
    %v290 = vunpack.c.l.b16 %v113
    %v291 = vunpack.c.h.b16 %v113
    %v292 = vunpack.c.l.b16 %v114
    %v293 = vunpack.c.h.b16 %v114
    %v294 = vunpack.c.l.b16 %v115
    %v295 = vunpack.c.h.b16 %v115
    %v296 = vunpack.c.l.b16 %v116
    %v297 = vunpack.c.h.b16 %v116
    %v298 = vunpack.c.l.b16 %v117
    %v299 = vunpack.c.h.b16 %v117
    %v300 = vunpack.c.l.b16 %v118
    %v301 = vunpack.c.h.b16 %v118
    %v302 = vunpack.c.l.b16 %v119
    %v303 = vunpack.c.h.b16 %v119
    %v304 = vunpack.c.l.b16 %v120
    %v305 = vunpack.c.h.b16 %v120
    %v306 = vunpack.c.l.b16 %v121
    %v307 = vunpack.c.h.b16 %v121
    %v308 = vunpack.c.l.b16 %v122
    %v309 = vunpack.c.h.b16 %v122
    %v310 = vunpack.c.l.b16 %v123
    %v311 = vunpack.c.h.b16 %v123
    %v312 = vunpack.c.l.b16 %v124
    %v313 = vunpack.c.h.b16 %v124
    %v314 = vunpack.c.l.b16 %v125
    %v315 = vunpack.c.h.b16 %v125
    %v316 = vunpack.c.l.b16 %v126
    %v317 = vunpack.c.h.b16 %v126
    %v318 = vunpack.c.l.b16 %v127
    %v319 = vunpack.c.h.b16 %v127
    %v320 = vpack.c.b16 %v196, %v192
    %v321 = vpack.c.b16 %v197, %v193
    %v322 = vpack.c.b16 %v198, %v194
    %v323 = vpack.c.b16 %v199, %v195
    %v324 = vpack.c.b16 %v204, %v200
    %v325 = vpack.c.b16 %v205, %v201
    %v326 = vpack.c.b16 %v206, %v202
    %v327 = vpack.c.b16 %v207, %v203
    %v328 = vpack.c.b16 %v212, %v208
    %v329 = vpack.c.b16 %v213, %v209
    %v330 = vpack.c.b16 %v214, %v210
    %v331 = vpack.c.b16 %v215, %v211
    %v332 = vpack.c.b16 %v220, %v216
    %v333 = vpack.c.b16 %v221, %v217
    %v334 = vpack.c.b16 %v222, %v218
    %v335 = vpack.c.b16 %v223, %v219
    %v336 = vpack.c.b16 %v228, %v224
    %v337 = vpack.c.b16 %v229, %v225
    %v338 = vpack.c.b16 %v230, %v226
    %v339 = vpack.c.b16 %v231, %v227
    %v340 = vpack.c.b16 %v236, %v232
    %v341 = vpack.c.b16 %v237, %v233
    %v342 = vpack.c.b16 %v238, %v234
    %v343 = vpack.c.b16 %v239, %v235
    %v344 = vpack.c.b16 %v244, %v240
    %v345 = vpack.c.b16 %v245, %v241
    %v346 = vpack.c.b16 %v246, %v242
    %v347 = vpack.c.b16 %v247, %v243
    %v348 = vpack.c.b16 %v252, %v248
    %v349 = vpack.c.b16 %v253, %v249
    %v350 = vpack.c.b16 %v254, %v250
    %v351 = vpack.c.b16 %v255, %v251
    %v352 = vpack.c.b16 %v260, %v256
    %v353 = vpack.c.b16 %v261, %v257
    %v354 = vpack.c.b16 %v262, %v258
    %v355 = vpack.c.b16 %v263, %v259
    %v356 = vpack.c.b16 %v268, %v264
    %v357 = vpack.c.b16 %v269, %v265
    %v358 = vpack.c.b16 %v270, %v266
    %v359 = vpack.c.b16 %v271, %v267
    %v360 = vpack.c.b16 %v276, %v272
    %v361 = vpack.c.b16 %v277, %v273
    %v362 = vpack.c.b16 %v278, %v274
    %v363 = vpack.c.b16 %v279, %v275
    %v364 = vpack.c.b16 %v284, %v280
    %v365 = vpack.c.b16 %v285, %v281
    %v366 = vpack.c.b16 %v286, %v282
    %v367 = vpack.c.b16 %v287, %v283
    %v368 = vpack.c.b16 %v292, %v288
    %v369 = vpack.c.b16 %v293, %v289
    %v370 = vpack.c.b16 %v294, %v290
    %v371 = vpack.c.b16 %v295, %v291
    %v372 = vpack.c.b16 %v300, %v296
    %v373 = vpack.c.b16 %v301, %v297
    %v374 = vpack.c.b16 %v302, %v298
    %v375 = vpack.c.b16 %v303, %v299
    %v376 = vpack.c.b16 %v308, %v304
    %v377 = vpack.c.b16 %v309, %v305
    %v378 = vpack.c.b16 %v310, %v306
    %v379 = vpack.c.b16 %v311, %v307
    %v380 = vpack.c.b16 %v316, %v312
    %v381 = vpack.c.b16 %v317, %v313
    %v382 = vpack.c.b16 %v318, %v314
    %v383 = vpack.c.b16 %v319, %v315
    %448 = vmatprep.subr.bf16.mxu0 %v321
    %449 = vmatpush1.bf16.msra.mxu0 %v320
    %450 = vmatprep.subr.bf16.mxu0 %v325
    %451 = vmatpush1.bf16.msra.mxu0 %v324
    %452 = vmatprep.subr.bf16.mxu0 %v329
    %453 = vmatpush1.bf16.msra.mxu0 %v328
    %454 = vmatprep.subr.bf16.mxu0 %v333
    %455 = vmatpush1.bf16.msra.mxu0 %v332
    %456 = vmatprep.subr.bf16.mxu0 %v337
    %457 = vmatpush1.bf16.msra.mxu0 %v336
    %458 = vmatprep.subr.bf16.mxu0 %v341
    %459 = vmatpush1.bf16.msra.mxu0 %v340
    %460 = vmatprep.subr.bf16.mxu0 %v345
    %461 = vmatpush1.bf16.msra.mxu0 %v344
    %462 = vmatprep.subr.bf16.mxu0 %v349
    %463 = vmatpush1.bf16.msra.mxu0 %v348
    %464 = vmatprep.subr.bf16.mxu0 %v353
    %465 = vmatpush1.bf16.msra.mxu0 %v352
    %466 = vmatprep.subr.bf16.mxu0 %v357
    %467 = vmatpush1.bf16.msra.mxu0 %v356
    %468 = vmatprep.subr.bf16.mxu0 %v361
    %469 = vmatpush1.bf16.msra.mxu0 %v360
    %470 = vmatprep.subr.bf16.mxu0 %v365
    %471 = vmatpush1.bf16.msra.mxu0 %v364
    %472 = vmatprep.subr.bf16.mxu0 %v369
    %473 = vmatpush1.bf16.msra.mxu0 %v368
    %474 = vmatprep.subr.bf16.mxu0 %v373
    %475 = vmatpush1.bf16.msra.mxu0 %v372
    %476 = vmatprep.subr.bf16.mxu0 %v377
    %477 = vmatpush1.bf16.msra.mxu0 %v376
    %478 = vmatprep.subr.bf16.mxu0 %v381
    %479 = vmatpush1.bf16.msra.mxu0 %v380
    %480 = vmatprep.mubr.bf16.mxu0 %v63
    %481 = vmatmul.mubr.bf16.gmra.mrb[0].mxu0 %v62
    %v482 = vpop.f32.mrb[0].mxu0
    %v483 = vadd.f32 0.0, %v482
    %v484 = vpop.f32.mrb[0].mxu0
    %v485 = vadd.f32 0.0, %v484
    %v486 = vpop.f32.mrb[0].mxu0
    %v487 = vadd.f32 0.0, %v486
    %v488 = vpop.f32.mrb[0].mxu0
    %v489 = vadd.f32 0.0, %v488
    %490 = vdwg.mxu0
    %491 = vmatprep.subr.bf16.mxu0 %v323
    %492 = vmatpush1.bf16.msra.mxu0 %v322
    %493 = vmatprep.subr.bf16.mxu0 %v327
    %494 = vmatpush1.bf16.msra.mxu0 %v326
    %495 = vmatprep.subr.bf16.mxu0 %v331
    %496 = vmatpush1.bf16.msra.mxu0 %v330
    %497 = vmatprep.subr.bf16.mxu0 %v335
    %498 = vmatpush1.bf16.msra.mxu0 %v334
    %499 = vmatprep.subr.bf16.mxu0 %v339
    %500 = vmatpush1.bf16.msra.mxu0 %v338
    %501 = vmatprep.subr.bf16.mxu0 %v343
    %502 = vmatpush1.bf16.msra.mxu0 %v342
    %503 = vmatprep.subr.bf16.mxu0 %v347
    %504 = vmatpush1.bf16.msra.mxu0 %v346
    %505 = vmatprep.subr.bf16.mxu0 %v351
    %506 = vmatpush1.bf16.msra.mxu0 %v350
    %507 = vmatprep.subr.bf16.mxu0 %v355
    %508 = vmatpush1.bf16.msra.mxu0 %v354
    %509 = vmatprep.subr.bf16.mxu0 %v359
    %510 = vmatpush1.bf16.msra.mxu0 %v358
    %511 = vmatprep.subr.bf16.mxu0 %v363
    %512 = vmatpush1.bf16.msra.mxu0 %v362
    %513 = vmatprep.subr.bf16.mxu0 %v367
    %514 = vmatpush1.bf16.msra.mxu0 %v366
    %515 = vmatprep.subr.bf16.mxu0 %v371
    %516 = vmatpush1.bf16.msra.mxu0 %v370
    %517 = vmatprep.subr.bf16.mxu0 %v375
    %518 = vmatpush1.bf16.msra.mxu0 %v374
    %519 = vmatprep.subr.bf16.mxu0 %v379
    %520 = vmatpush1.bf16.msra.mxu0 %v378
    %521 = vmatprep.subr.bf16.mxu0 %v383
    %522 = vmatpush1.bf16.msra.mxu0 %v382
    %523 = vmatprep.mubr.bf16.mxu0 %v63
    %524 = vmatmul.mubr.bf16.gmra.mrb[0].mxu0 %v62
    %v525 = vpop.f32.mrb[0].mxu0
    %v526 = vadd.f32 0.0, %v525
    %v527 = vpop.f32.mrb[0].mxu0
    %v528 = vadd.f32 0.0, %v527
    %v529 = vpop.f32.mrb[0].mxu0
    %v530 = vadd.f32 0.0, %v529
    %v531 = vpop.f32.mrb[0].mxu0
    %v532 = vadd.f32 0.0, %v531
    %533 = vdwg.mxu0
    %p534 = scmp.eq.s32.totalorder 0, 0
    // Predicated region
    $region42: #{particle_picker_forward.1} parent=1 // pred_check
      %p535 = pneg %p534
    $region43: #{particle_picker_forward.1} parent=1 // pred_check_branch
      %537 = sbr.rel (%p535) target = $region45
    $region44: #{particle_picker_forward.1} parent=1 // pred_region
      %538 = vst [vmem:[#allocation2] sm:$0xff] %v483
      %539 = vst [vmem:[#allocation2 + $0x8] sm:$0xff] %v485
      %540 = vst [vmem:[#allocation2 + $0x10] sm:$0xff] %v526
      %541 = vst [vmem:[#allocation2 + $0x18] sm:$0xff] %v528
      %542 = vst [vmem:[#allocation2 + $0x20] sm:$0xff] %v487
      %543 = vst [vmem:[#allocation2 + $0x28] sm:$0xff] %v489
      %544 = vst [vmem:[#allocation2 + $0x30] sm:$0xff] %v530
      %545 = vst [vmem:[#allocation2 + $0x38] sm:$0xff] %v532
    $region45: #{particle_picker_forward.1} parent=1 // pred_fallthru
      _
    %p546 = scmp.gt.s32.totalorder 0, 0
    // Predicated region
    $region46: #{particle_picker_forward.1} parent=1 // pred_check
      %p547 = pneg %p546
    $region47: #{particle_picker_forward.1} parent=1 // pred_check_branch
      %549 = sbr.rel (%p547) target = $region49
    $region48: #{particle_picker_forward.1} parent=1 // pred_region
      %v550 = vld [vmem:[#allocation2] sm:$0xff]
      %v551 = vld [vmem:[#allocation2 + $0x8] sm:$0xff]
      %v552 = vld [vmem:[#allocation2 + $0x10] sm:$0xff]
      %v553 = vld [vmem:[#allocation2 + $0x18] sm:$0xff]
      %v554 = vld [vmem:[#allocation2 + $0x20] sm:$0xff]
      %v555 = vld [vmem:[#allocation2 + $0x28] sm:$0xff]
      %v556 = vld [vmem:[#allocation2 + $0x30] sm:$0xff]
      %v557 = vld [vmem:[#allocation2 + $0x38] sm:$0xff]
      %v558 = vadd.f32 %v550, %v483
      %v559 = vadd.f32 %v551, %v485
      %v560 = vadd.f32 %v552, %v526
      %v561 = vadd.f32 %v553, %v528
      %v562 = vadd.f32 %v554, %v487
      %v563 = vadd.f32 %v555, %v489
      %v564 = vadd.f32 %v556, %v530
      %v565 = vadd.f32 %v557, %v532
      %566 = vst [vmem:[#allocation2] sm:$0xff] %v558
      %567 = vst [vmem:[#allocation2 + $0x8] sm:$0xff] %v559
      %568 = vst [vmem:[#allocation2 + $0x10] sm:$0xff] %v560
      %569 = vst [vmem:[#allocation2 + $0x18] sm:$0xff] %v561
      %570 = vst [vmem:[#allocation2 + $0x20] sm:$0xff] %v562
      %571 = vst [vmem:[#allocation2 + $0x28] sm:$0xff] %v563
      %572 = vst [vmem:[#allocation2 + $0x30] sm:$0xff] %v564
      %573 = vst [vmem:[#allocation2 + $0x38] sm:$0xff] %v565
    $region49: #{particle_picker_forward.1} parent=1 // pred_fallthru
      _
    // Predicated region
    $region50: #{particle_picker_forward.1} parent=1 // pred_check
      %p574 = pneg %p534
    $region51: #{particle_picker_forward.1} parent=1 // pred_check_branch
      %576 = sbr.rel (%p574) target = $region53
    $region52: #{particle_picker_forward.1} parent=1 // pred_region
      %v577 = vld [vmem:[#allocation2] sm:$0xff]
      %v578 = vld [vmem:[#allocation2 + $0x8] sm:$0xff]
      %v579 = vld [vmem:[#allocation2 + $0x10] sm:$0xff]
      %v580 = vld [vmem:[#allocation2 + $0x18] sm:$0xff]
      %v581 = vld [vmem:[#allocation2 + $0x20] sm:$0xff]
      %v582 = vld [vmem:[#allocation2 + $0x28] sm:$0xff]
      %v583 = vld [vmem:[#allocation2 + $0x30] sm:$0xff]
      %v584 = vld [vmem:[#allocation2 + $0x38] sm:$0xff]
      %v585 = vld [vmem:[%s2] sm:$0xf]
      %v587 = vlaneseq
      %v588 = vshrl.u32 %v587, 7
      %v589 = vsub.s32 0, %v588
      %v590 = vrot.slane %v585, %v589
      %v591 = vlaneseq
      %v592 = vshrl.u32 %v591, 7
      %v593 = vsub.s32 1, %v592
      %v594 = vrot.slane %v585, %v593
      %v595 = vlaneseq
      %v596 = vshrl.u32 %v595, 7
      %v597 = vsub.s32 2, %v596
      %v598 = vrot.slane %v585, %v597
      %v599 = vlaneseq
      %v600 = vshrl.u32 %v599, 7
      %v601 = vsub.s32 3, %v600
      %v602 = vrot.slane %v585, %v601
      %v607 = vadd.f32 %v577, %v590
      %v608 = vadd.f32 %v578, %v594
      %v609 = vadd.f32 %v579, %v598
      %v610 = vadd.f32 %v580, %v602
      %v611 = vadd.f32 %v581, %v590
      %v612 = vadd.f32 %v582, %v594
      %v613 = vadd.f32 %v583, %v598
      %v614 = vadd.f32 %v584, %v602
      %v615 = vmax.f32 %v607, 0.0
      %v616 = vmax.f32 %v608, 0.0
      %v617 = vmax.f32 %v609, 0.0
      %v618 = vmax.f32 %v610, 0.0
      %v619 = vmax.f32 %v611, 0.0
      %v620 = vmax.f32 %v612, 0.0
      %v621 = vmax.f32 %v613, 0.0
      %v622 = vmax.f32 %v614, 0.0
      %v623 = vpack.c.bf16 %v619, %v615
      %v624 = vpack.c.bf16 %v620, %v616
      %v625 = vpack.c.bf16 %v621, %v617
      %v626 = vpack.c.bf16 %v622, %v618
      %v627 = vld [vmem:[#allocation5] sm:$0xff]
      %v628 = vld [vmem:[#allocation5 + $0x8] sm:$0xff]
      %v629 = vld [vmem:[#allocation5 + $0x10] sm:$0xff]
      %v630 = vld [vmem:[#allocation5 + $0x18] sm:$0xff]
      %v631 = vld [vmem:[#allocation5 + $0x20] sm:$0xff]
      %v632 = vld [vmem:[#allocation5 + $0x28] sm:$0xff]
      %v633 = vld [vmem:[#allocation5 + $0x30] sm:$0xff]
      %v634 = vld [vmem:[#allocation5 + $0x38] sm:$0xff]
      %v635 = vld [vmem:[#allocation5 + $0x40] sm:$0xff]
      %v636 = vld [vmem:[#allocation5 + $0x48] sm:$0xff]
      %v637 = vld [vmem:[#allocation5 + $0x50] sm:$0xff]
      %v638 = vld [vmem:[#allocation5 + $0x58] sm:$0xff]
      %v639 = vld [vmem:[#allocation5 + $0x60] sm:$0xff]
      %v640 = vld [vmem:[#allocation5 + $0x68] sm:$0xff]
      %v641 = vld [vmem:[#allocation5 + $0x70] sm:$0xff]
      %v642 = vld [vmem:[#allocation5 + $0x78] sm:$0xff]
      %v643 = vld [vmem:[#allocation5 + $0x80] sm:$0xff]
      %v644 = vld [vmem:[#allocation5 + $0x88] sm:$0xff]
      %v645 = vld [vmem:[#allocation5 + $0x90] sm:$0xff]
      %v646 = vld [vmem:[#allocation5 + $0x98] sm:$0xff]
      %v647 = vld [vmem:[#allocation5 + $0xa0] sm:$0xff]
      %v648 = vld [vmem:[#allocation5 + $0xa8] sm:$0xff]
      %v649 = vld [vmem:[#allocation5 + $0xb0] sm:$0xff]
      %v650 = vld [vmem:[#allocation5 + $0xb8] sm:$0xff]
      %v651 = vld [vmem:[#allocation5 + $0xc0] sm:$0xff]
      %v652 = vld [vmem:[#allocation5 + $0xc8] sm:$0xff]
      %v653 = vld [vmem:[#allocation5 + $0xd0] sm:$0xff]
      %v654 = vld [vmem:[#allocation5 + $0xd8] sm:$0xff]
      %v655 = vld [vmem:[#allocation5 + $0xe0] sm:$0xff]
      %v656 = vld [vmem:[#allocation5 + $0xe8] sm:$0xff]
      %v657 = vld [vmem:[#allocation5 + $0xf0] sm:$0xff]
      %v658 = vld [vmem:[#allocation5 + $0xf8] sm:$0xff]
      %v659 = vld [vmem:[#allocation5 + $0x100] sm:$0xff]
      %v660 = vld [vmem:[#allocation5 + $0x108] sm:$0xff]
      %v661 = vld [vmem:[#allocation5 + $0x110] sm:$0xff]
      %v662 = vld [vmem:[#allocation5 + $0x118] sm:$0xff]
      %v663 = vld [vmem:[#allocation5 + $0x120] sm:$0xff]
      %v664 = vld [vmem:[#allocation5 + $0x128] sm:$0xff]
      %v665 = vld [vmem:[#allocation5 + $0x130] sm:$0xff]
      %v666 = vld [vmem:[#allocation5 + $0x138] sm:$0xff]
      %v667 = vld [vmem:[#allocation5 + $0x140] sm:$0xff]
      %v668 = vld [vmem:[#allocation5 + $0x148] sm:$0xff]
      %v669 = vld [vmem:[#allocation5 + $0x150] sm:$0xff]
      %v670 = vld [vmem:[#allocation5 + $0x158] sm:$0xff]
      %v671 = vld [vmem:[#allocation5 + $0x160] sm:$0xff]
      %v672 = vld [vmem:[#allocation5 + $0x168] sm:$0xff]
      %v673 = vld [vmem:[#allocation5 + $0x170] sm:$0xff]
      %v674 = vld [vmem:[#allocation5 + $0x178] sm:$0xff]
      %v675 = vld [vmem:[#allocation5 + $0x180] sm:$0xff]
      %v676 = vld [vmem:[#allocation5 + $0x188] sm:$0xff]
      %v677 = vld [vmem:[#allocation5 + $0x190] sm:$0xff]
      %v678 = vld [vmem:[#allocation5 + $0x198] sm:$0xff]
      %v679 = vld [vmem:[#allocation5 + $0x1a0] sm:$0xff]
      %v680 = vld [vmem:[#allocation5 + $0x1a8] sm:$0xff]
      %v681 = vld [vmem:[#allocation5 + $0x1b0] sm:$0xff]
      %v682 = vld [vmem:[#allocation5 + $0x1b8] sm:$0xff]
      %v683 = vld [vmem:[#allocation5 + $0x1c0] sm:$0xff]
      %v684 = vld [vmem:[#allocation5 + $0x1c8] sm:$0xff]
      %v685 = vld [vmem:[#allocation5 + $0x1d0] sm:$0xff]
      %v686 = vld [vmem:[#allocation5 + $0x1d8] sm:$0xff]
      %v687 = vld [vmem:[#allocation5 + $0x1e0] sm:$0xff]
      %v688 = vld [vmem:[#allocation5 + $0x1e8] sm:$0xff]
      %v689 = vld [vmem:[#allocation5 + $0x1f0] sm:$0xff]
      %v690 = vld [vmem:[#allocation5 + $0x1f8] sm:$0xff]
      %v691 = vld [vmem:[%s4] sm:$0x3]
      %v693 = vlaneseq
      %v694 = vshrl.u32 %v693, 7
      %v695 = vsub.s32 0, %v694
      %v696 = vrot.slane %v691, %v695
      %v697 = vlaneseq
      %v698 = vshrl.u32 %v697, 7
      %v699 = vsub.s32 1, %v698
      %v700 = vrot.slane %v691, %v699
      %v767 = vunpack.c.l.b16 %v627
      %v768 = vunpack.c.h.b16 %v627
      %v769 = vunpack.c.l.b16 %v628
      %v770 = vunpack.c.h.b16 %v628
      %v771 = vunpack.c.l.b16 %v629
      %v772 = vunpack.c.h.b16 %v629
      %v773 = vunpack.c.l.b16 %v630
      %v774 = vunpack.c.h.b16 %v630
      %v775 = vunpack.c.l.b16 %v631
      %v776 = vunpack.c.h.b16 %v631
      %v777 = vunpack.c.l.b16 %v632
      %v778 = vunpack.c.h.b16 %v632
      %v779 = vunpack.c.l.b16 %v633
      %v780 = vunpack.c.h.b16 %v633
      %v781 = vunpack.c.l.b16 %v634
      %v782 = vunpack.c.h.b16 %v634
      %v783 = vunpack.c.l.b16 %v635
      %v784 = vunpack.c.h.b16 %v635
      %v785 = vunpack.c.l.b16 %v636
      %v786 = vunpack.c.h.b16 %v636
      %v787 = vunpack.c.l.b16 %v637
      %v788 = vunpack.c.h.b16 %v637
      %v789 = vunpack.c.l.b16 %v638
      %v790 = vunpack.c.h.b16 %v638
      %v791 = vunpack.c.l.b16 %v639
      %v792 = vunpack.c.h.b16 %v639
      %v793 = vunpack.c.l.b16 %v640
      %v794 = vunpack.c.h.b16 %v640
      %v795 = vunpack.c.l.b16 %v641
      %v796 = vunpack.c.h.b16 %v641
      %v797 = vunpack.c.l.b16 %v642
      %v798 = vunpack.c.h.b16 %v642
      %v799 = vunpack.c.l.b16 %v643
      %v800 = vunpack.c.h.b16 %v643
      %v801 = vunpack.c.l.b16 %v644
      %v802 = vunpack.c.h.b16 %v644
      %v803 = vunpack.c.l.b16 %v645
      %v804 = vunpack.c.h.b16 %v645
      %v805 = vunpack.c.l.b16 %v646
      %v806 = vunpack.c.h.b16 %v646
      %v807 = vunpack.c.l.b16 %v647
      %v808 = vunpack.c.h.b16 %v647
      %v809 = vunpack.c.l.b16 %v648
      %v810 = vunpack.c.h.b16 %v648
      %v811 = vunpack.c.l.b16 %v649
      %v812 = vunpack.c.h.b16 %v649
      %v813 = vunpack.c.l.b16 %v650
      %v814 = vunpack.c.h.b16 %v650
      %v815 = vunpack.c.l.b16 %v651
      %v816 = vunpack.c.h.b16 %v651
      %v817 = vunpack.c.l.b16 %v652
      %v818 = vunpack.c.h.b16 %v652
      %v819 = vunpack.c.l.b16 %v653
      %v820 = vunpack.c.h.b16 %v653
      %v821 = vunpack.c.l.b16 %v654
      %v822 = vunpack.c.h.b16 %v654
      %v823 = vunpack.c.l.b16 %v655
      %v824 = vunpack.c.h.b16 %v655
      %v825 = vunpack.c.l.b16 %v656
      %v826 = vunpack.c.h.b16 %v656
      %v827 = vunpack.c.l.b16 %v657
      %v828 = vunpack.c.h.b16 %v657
      %v829 = vunpack.c.l.b16 %v658
      %v830 = vunpack.c.h.b16 %v658
      %v831 = vunpack.c.l.b16 %v659
      %v832 = vunpack.c.h.b16 %v659
      %v833 = vunpack.c.l.b16 %v660
      %v834 = vunpack.c.h.b16 %v660
      %v835 = vunpack.c.l.b16 %v661
      %v836 = vunpack.c.h.b16 %v661
      %v837 = vunpack.c.l.b16 %v662
      %v838 = vunpack.c.h.b16 %v662
      %v839 = vunpack.c.l.b16 %v663
      %v840 = vunpack.c.h.b16 %v663
      %v841 = vunpack.c.l.b16 %v664
      %v842 = vunpack.c.h.b16 %v664
      %v843 = vunpack.c.l.b16 %v665
      %v844 = vunpack.c.h.b16 %v665
      %v845 = vunpack.c.l.b16 %v666
      %v846 = vunpack.c.h.b16 %v666
      %v847 = vunpack.c.l.b16 %v667
      %v848 = vunpack.c.h.b16 %v667
      %v849 = vunpack.c.l.b16 %v668
      %v850 = vunpack.c.h.b16 %v668
      %v851 = vunpack.c.l.b16 %v669
      %v852 = vunpack.c.h.b16 %v669
      %v853 = vunpack.c.l.b16 %v670
      %v854 = vunpack.c.h.b16 %v670
      %v855 = vunpack.c.l.b16 %v671
      %v856 = vunpack.c.h.b16 %v671
      %v857 = vunpack.c.l.b16 %v672
      %v858 = vunpack.c.h.b16 %v672
      %v859 = vunpack.c.l.b16 %v673
      %v860 = vunpack.c.h.b16 %v673
      %v861 = vunpack.c.l.b16 %v674
      %v862 = vunpack.c.h.b16 %v674
      %v863 = vunpack.c.l.b16 %v675
      %v864 = vunpack.c.h.b16 %v675
      %v865 = vunpack.c.l.b16 %v676
      %v866 = vunpack.c.h.b16 %v676
      %v867 = vunpack.c.l.b16 %v677
      %v868 = vunpack.c.h.b16 %v677
      %v869 = vunpack.c.l.b16 %v678
      %v870 = vunpack.c.h.b16 %v678
      %v871 = vunpack.c.l.b16 %v679
      %v872 = vunpack.c.h.b16 %v679
      %v873 = vunpack.c.l.b16 %v680
      %v874 = vunpack.c.h.b16 %v680
      %v875 = vunpack.c.l.b16 %v681
      %v876 = vunpack.c.h.b16 %v681
      %v877 = vunpack.c.l.b16 %v682
      %v878 = vunpack.c.h.b16 %v682
      %v879 = vunpack.c.l.b16 %v683
      %v880 = vunpack.c.h.b16 %v683
      %v881 = vunpack.c.l.b16 %v684
      %v882 = vunpack.c.h.b16 %v684
      %v883 = vunpack.c.l.b16 %v685
      %v884 = vunpack.c.h.b16 %v685
      %v885 = vunpack.c.l.b16 %v686
      %v886 = vunpack.c.h.b16 %v686
      %v887 = vunpack.c.l.b16 %v687
      %v888 = vunpack.c.h.b16 %v687
      %v889 = vunpack.c.l.b16 %v688
      %v890 = vunpack.c.h.b16 %v688
      %v891 = vunpack.c.l.b16 %v689
      %v892 = vunpack.c.h.b16 %v689
      %v893 = vunpack.c.l.b16 %v690
      %v894 = vunpack.c.h.b16 %v690
      %v895 = vpack.c.b16 %v769, %v767
      %v896 = vpack.c.b16 %v770, %v768
      %v897 = vpack.c.b16 %v773, %v771
      %v898 = vpack.c.b16 %v774, %v772
      %v899 = vpack.c.b16 %v777, %v775
      %v900 = vpack.c.b16 %v778, %v776
      %v901 = vpack.c.b16 %v781, %v779
      %v902 = vpack.c.b16 %v782, %v780
      %v903 = vpack.c.b16 %v785, %v783
      %v904 = vpack.c.b16 %v786, %v784
      %v905 = vpack.c.b16 %v789, %v787
      %v906 = vpack.c.b16 %v790, %v788
      %v907 = vpack.c.b16 %v793, %v791
      %v908 = vpack.c.b16 %v794, %v792
      %v909 = vpack.c.b16 %v797, %v795
      %v910 = vpack.c.b16 %v798, %v796
      %v911 = vpack.c.b16 %v801, %v799
      %v912 = vpack.c.b16 %v802, %v800
      %v913 = vpack.c.b16 %v805, %v803
      %v914 = vpack.c.b16 %v806, %v804
      %v915 = vpack.c.b16 %v809, %v807
      %v916 = vpack.c.b16 %v810, %v808
      %v917 = vpack.c.b16 %v813, %v811
      %v918 = vpack.c.b16 %v814, %v812
      %v919 = vpack.c.b16 %v817, %v815
      %v920 = vpack.c.b16 %v818, %v816
      %v921 = vpack.c.b16 %v821, %v819
      %v922 = vpack.c.b16 %v822, %v820
      %v923 = vpack.c.b16 %v825, %v823
      %v924 = vpack.c.b16 %v826, %v824
      %v925 = vpack.c.b16 %v829, %v827
      %v926 = vpack.c.b16 %v830, %v828
      %v927 = vpack.c.b16 %v833, %v831
      %v928 = vpack.c.b16 %v834, %v832
      %v929 = vpack.c.b16 %v837, %v835
      %v930 = vpack.c.b16 %v838, %v836
      %v931 = vpack.c.b16 %v841, %v839
      %v932 = vpack.c.b16 %v842, %v840
      %v933 = vpack.c.b16 %v845, %v843
      %v934 = vpack.c.b16 %v846, %v844
      %v935 = vpack.c.b16 %v849, %v847
      %v936 = vpack.c.b16 %v850, %v848
      %v937 = vpack.c.b16 %v853, %v851
      %v938 = vpack.c.b16 %v854, %v852
      %v939 = vpack.c.b16 %v857, %v855
      %v940 = vpack.c.b16 %v858, %v856
      %v941 = vpack.c.b16 %v861, %v859
      %v942 = vpack.c.b16 %v862, %v860
      %v943 = vpack.c.b16 %v865, %v863
      %v944 = vpack.c.b16 %v866, %v864
      %v945 = vpack.c.b16 %v869, %v867
      %v946 = vpack.c.b16 %v870, %v868
      %v947 = vpack.c.b16 %v873, %v871
      %v948 = vpack.c.b16 %v874, %v872
      %v949 = vpack.c.b16 %v877, %v875
      %v950 = vpack.c.b16 %v878, %v876
      %v951 = vpack.c.b16 %v881, %v879
      %v952 = vpack.c.b16 %v882, %v880
      %v953 = vpack.c.b16 %v885, %v883
      %v954 = vpack.c.b16 %v886, %v884
      %v955 = vpack.c.b16 %v889, %v887
      %v956 = vpack.c.b16 %v890, %v888
      %v957 = vpack.c.b16 %v893, %v891
      %v958 = vpack.c.b16 %v894, %v892
      %1023 = vmatprep.subr.bf16.mxu0 %v896
      %1024 = vmatpush1.bf16.msra.mxu0 %v895
      %1025 = vmatprep.subr.bf16.mxu0 %v898
      %1026 = vmatpush1.bf16.msra.mxu0 %v897
      %1027 = vmatprep.subr.bf16.mxu0 %v900
      %1028 = vmatpush1.bf16.msra.mxu0 %v899
      %1029 = vmatprep.subr.bf16.mxu0 %v902
      %1030 = vmatpush1.bf16.msra.mxu0 %v901
      %1031 = vmatprep.subr.bf16.mxu0 %v904
      %1032 = vmatpush1.bf16.msra.mxu0 %v903
      %1033 = vmatprep.subr.bf16.mxu0 %v906
      %1034 = vmatpush1.bf16.msra.mxu0 %v905
      %1035 = vmatprep.subr.bf16.mxu0 %v908
      %1036 = vmatpush1.bf16.msra.mxu0 %v907
      %1037 = vmatprep.subr.bf16.mxu0 %v910
      %1038 = vmatpush1.bf16.msra.mxu0 %v909
      %1039 = vmatprep.subr.bf16.mxu0 %v912
      %1040 = vmatpush1.bf16.msra.mxu0 %v911
      %1041 = vmatprep.subr.bf16.mxu0 %v914
      %1042 = vmatpush1.bf16.msra.mxu0 %v913
      %1043 = vmatprep.subr.bf16.mxu0 %v916
      %1044 = vmatpush1.bf16.msra.mxu0 %v915
      %1045 = vmatprep.subr.bf16.mxu0 %v918
      %1046 = vmatpush1.bf16.msra.mxu0 %v917
      %1047 = vmatprep.subr.bf16.mxu0 %v920
      %1048 = vmatpush1.bf16.msra.mxu0 %v919
      %1049 = vmatprep.subr.bf16.mxu0 %v922
      %1050 = vmatpush1.bf16.msra.mxu0 %v921
      %1051 = vmatprep.subr.bf16.mxu0 %v924
      %1052 = vmatpush1.bf16.msra.mxu0 %v923
      %1053 = vmatprep.subr.bf16.mxu0 %v926
      %1054 = vmatpush1.bf16.msra.mxu0 %v925
      %1055 = vmatprep.mubr.bf16.mxu0 %v624
      %1056 = vmatmul.mubr.bf16.gmra.mrb[0].mxu0 %v623
      %v1057 = vpop.f32.mrb[0].mxu0
      %v1058 = vadd.f32 %v696, %v1057
      %v1059 = vpop.f32.mrb[0].mxu0
      %v1060 = vadd.f32 %v700, %v1059
      %v1061 = vpop.f32.mrb[0].mxu0
      %v1062 = vadd.f32 %v696, %v1061
      %v1063 = vpop.f32.mrb[0].mxu0
      %v1064 = vadd.f32 %v700, %v1063
      %1065 = vdwg.mxu0
      %1066 = vmatprep.subr.bf16.mxu0 %v928
      %1067 = vmatpush1.bf16.msra.mxu0 %v927
      %1068 = vmatprep.subr.bf16.mxu0 %v930
      %1069 = vmatpush1.bf16.msra.mxu0 %v929
      %1070 = vmatprep.subr.bf16.mxu0 %v932
      %1071 = vmatpush1.bf16.msra.mxu0 %v931
      %1072 = vmatprep.subr.bf16.mxu0 %v934
      %1073 = vmatpush1.bf16.msra.mxu0 %v933
      %1074 = vmatprep.subr.bf16.mxu0 %v936
      %1075 = vmatpush1.bf16.msra.mxu0 %v935
      %1076 = vmatprep.subr.bf16.mxu0 %v938
      %1077 = vmatpush1.bf16.msra.mxu0 %v937
      %1078 = vmatprep.subr.bf16.mxu0 %v940
      %1079 = vmatpush1.bf16.msra.mxu0 %v939
      %1080 = vmatprep.subr.bf16.mxu0 %v942
      %1081 = vmatpush1.bf16.msra.mxu0 %v941
      %1082 = vmatprep.subr.bf16.mxu0 %v944
      %1083 = vmatpush1.bf16.msra.mxu0 %v943
      %1084 = vmatprep.subr.bf16.mxu0 %v946
      %1085 = vmatpush1.bf16.msra.mxu0 %v945
      %1086 = vmatprep.subr.bf16.mxu0 %v948
      %1087 = vmatpush1.bf16.msra.mxu0 %v947
      %1088 = vmatprep.subr.bf16.mxu0 %v950
      %1089 = vmatpush1.bf16.msra.mxu0 %v949
      %1090 = vmatprep.subr.bf16.mxu0 %v952
      %1091 = vmatpush1.bf16.msra.mxu0 %v951
      %1092 = vmatprep.subr.bf16.mxu0 %v954
      %1093 = vmatpush1.bf16.msra.mxu0 %v953
      %1094 = vmatprep.subr.bf16.mxu0 %v956
      %1095 = vmatpush1.bf16.msra.mxu0 %v955
      %1096 = vmatprep.subr.bf16.mxu0 %v958
      %1097 = vmatpush1.bf16.msra.mxu0 %v957
      %1098 = vmatprep.mubr.bf16.mxu0 %v626
      %1099 = vmatmul.mubr.bf16.gmra.mrb[0].mxu0 %v625
      %v1100 = vpop.f32.mrb[0].mxu0
      %v1101 = vadd.f32 %v1058, %v1100
      %v1102 = vpop.f32.mrb[0].mxu0
      %v1103 = vadd.f32 %v1060, %v1102
      %v1104 = vpop.f32.mrb[0].mxu0
      %v1105 = vadd.f32 %v1062, %v1104
      %v1106 = vpop.f32.mrb[0].mxu0
      %v1107 = vadd.f32 %v1064, %v1106
      %1108 = vdwg.mxu0
      %v1109 = vmax.f32 %v1101, 0.0
      %v1110 = vmax.f32 %v1103, 0.0
      %v1111 = vmax.f32 %v1105, 0.0
      %v1112 = vmax.f32 %v1107, 0.0
      %v1113 = vpack.c.bf16 %v1111, %v1109
      %v1114 = vpack.c.bf16 %v1112, %v1110
      %v1115 = vld [vmem:[%s5] sm:$0xf]
      %v1116 = vld [vmem:[%s5 + $0x4] sm:$0xf]
      %v1117 = vld [vmem:[%s5 + $0x8] sm:$0xf]
      %v1118 = vld [vmem:[%s5 + $0xc] sm:$0xf]
      %v1119 = vld [vmem:[%s5 + $0x10] sm:$0xf]
      %v1120 = vld [vmem:[%s5 + $0x14] sm:$0xf]
      %v1121 = vld [vmem:[%s5 + $0x18] sm:$0xf]
      %v1122 = vld [vmem:[%s5 + $0x1c] sm:$0xf]
      %v1123 = vld [vmem:[%s5 + $0x20] sm:$0xf]
      %v1124 = vld [vmem:[%s5 + $0x24] sm:$0xf]
      %v1125 = vld [vmem:[%s5 + $0x28] sm:$0xf]
      %v1126 = vld [vmem:[%s5 + $0x2c] sm:$0xf]
      %v1127 = vld [vmem:[%s5 + $0x30] sm:$0xf]
      %v1128 = vld [vmem:[%s5 + $0x34] sm:$0xf]
      %v1129 = vld [vmem:[%s5 + $0x38] sm:$0xf]
      %v1130 = vld [vmem:[%s5 + $0x3c] sm:$0xf]
      %v1131 = vld [vmem:[%s5 + $0x40] sm:$0xf]
      %v1132 = vld [vmem:[%s5 + $0x44] sm:$0xf]
      %v1133 = vld [vmem:[%s5 + $0x48] sm:$0xf]
      %v1134 = vld [vmem:[%s5 + $0x4c] sm:$0xf]
      %v1135 = vld [vmem:[%s5 + $0x50] sm:$0xf]
      %v1136 = vld [vmem:[%s5 + $0x54] sm:$0xf]
      %v1137 = vld [vmem:[%s5 + $0x58] sm:$0xf]
      %v1138 = vld [vmem:[%s5 + $0x5c] sm:$0xf]
      %v1139 = vld [vmem:[%s5 + $0x60] sm:$0xf]
      %v1140 = vld [vmem:[%s5 + $0x64] sm:$0xf]
      %v1141 = vld [vmem:[%s5 + $0x68] sm:$0xf]
      %v1142 = vld [vmem:[%s5 + $0x6c] sm:$0xf]
      %v1143 = vld [vmem:[%s5 + $0x70] sm:$0xf]
      %v1144 = vld [vmem:[%s5 + $0x74] sm:$0xf]
      %v1145 = vld [vmem:[%s5 + $0x78] sm:$0xf]
      %v1146 = vld [vmem:[%s5 + $0x7c] sm:$0xf]
      %v1147 = vld [vmem:[%s6] sm:$0x1]
      %v1149 = vlaneseq
      %v1150 = vshrl.u32 %v1149, 7
      %v1151 = vsub.s32 0, %v1150
      %v1152 = vrot.slane %v1147, %v1151
      %v1186 = vunpack.c.l.b16 %v1115
      %v1187 = vunpack.c.l.b16 %v1116
      %v1188 = vunpack.c.l.b16 %v1117
      %v1189 = vunpack.c.l.b16 %v1118
      %v1190 = vunpack.c.l.b16 %v1119
      %v1191 = vunpack.c.l.b16 %v1120
      %v1192 = vunpack.c.l.b16 %v1121
      %v1193 = vunpack.c.l.b16 %v1122
      %v1194 = vunpack.c.l.b16 %v1123
      %v1195 = vunpack.c.l.b16 %v1124
      %v1196 = vunpack.c.l.b16 %v1125
      %v1197 = vunpack.c.l.b16 %v1126
      %v1198 = vunpack.c.l.b16 %v1127
      %v1199 = vunpack.c.l.b16 %v1128
      %v1200 = vunpack.c.l.b16 %v1129
      %v1201 = vunpack.c.l.b16 %v1130
      %v1202 = vunpack.c.l.b16 %v1131
      %v1203 = vunpack.c.l.b16 %v1132
      %v1204 = vunpack.c.l.b16 %v1133
      %v1205 = vunpack.c.l.b16 %v1134
      %v1206 = vunpack.c.l.b16 %v1135
      %v1207 = vunpack.c.l.b16 %v1136
      %v1208 = vunpack.c.l.b16 %v1137
      %v1209 = vunpack.c.l.b16 %v1138
      %v1210 = vunpack.c.l.b16 %v1139
      %v1211 = vunpack.c.l.b16 %v1140
      %v1212 = vunpack.c.l.b16 %v1141
      %v1213 = vunpack.c.l.b16 %v1142
      %v1214 = vunpack.c.l.b16 %v1143
      %v1215 = vunpack.c.l.b16 %v1144
      %v1216 = vunpack.c.l.b16 %v1145
      %v1217 = vunpack.c.l.b16 %v1146
      %v1218 = vpack.c.b16 %v1187, %v1186
      %v1219 = vpack.c.b16 %v1189, %v1188
      %v1220 = vpack.c.b16 %v1191, %v1190
      %v1221 = vpack.c.b16 %v1193, %v1192
      %v1222 = vpack.c.b16 %v1195, %v1194
      %v1223 = vpack.c.b16 %v1197, %v1196
      %v1224 = vpack.c.b16 %v1199, %v1198
      %v1225 = vpack.c.b16 %v1201, %v1200
      %v1226 = vpack.c.b16 %v1203, %v1202
      %v1227 = vpack.c.b16 %v1205, %v1204
      %v1228 = vpack.c.b16 %v1207, %v1206
      %v1229 = vpack.c.b16 %v1209, %v1208
      %v1230 = vpack.c.b16 %v1211, %v1210
      %v1231 = vpack.c.b16 %v1213, %v1212
      %v1232 = vpack.c.b16 %v1215, %v1214
      %v1233 = vpack.c.b16 %v1217, %v1216
      %1250 = vmatprep.subr.bf16.mxu0 0
      %1251 = vmatpush1.bf16.msra.mxu0 %v1218
      %1252 = vmatprep.subr.bf16.mxu0 0
      %1253 = vmatpush1.bf16.msra.mxu0 %v1219
      %1254 = vmatprep.subr.bf16.mxu0 0
      %1255 = vmatpush1.bf16.msra.mxu0 %v1220
      %1256 = vmatprep.subr.bf16.mxu0 0
      %1257 = vmatpush1.bf16.msra.mxu0 %v1221
      %1258 = vmatprep.subr.bf16.mxu0 0
      %1259 = vmatpush1.bf16.msra.mxu0 %v1222
      %1260 = vmatprep.subr.bf16.mxu0 0
      %1261 = vmatpush1.bf16.msra.mxu0 %v1223
      %1262 = vmatprep.subr.bf16.mxu0 0
      %1263 = vmatpush1.bf16.msra.mxu0 %v1224
      %1264 = vmatprep.subr.bf16.mxu0 0
      %1265 = vmatpush1.bf16.msra.mxu0 %v1225
      %1266 = vmatprep.subr.bf16.mxu0 0
      %1267 = vmatpush1.bf16.msra.mxu0 %v1226
      %1268 = vmatprep.subr.bf16.mxu0 0
      %1269 = vmatpush1.bf16.msra.mxu0 %v1227
      %1270 = vmatprep.subr.bf16.mxu0 0
      %1271 = vmatpush1.bf16.msra.mxu0 %v1228
      %1272 = vmatprep.subr.bf16.mxu0 0
      %1273 = vmatpush1.bf16.msra.mxu0 %v1229
      %1274 = vmatprep.subr.bf16.mxu0 0
      %1275 = vmatpush1.bf16.msra.mxu0 %v1230
      %1276 = vmatprep.subr.bf16.mxu0 0
      %1277 = vmatpush1.bf16.msra.mxu0 %v1231
      %1278 = vmatprep.subr.bf16.mxu0 0
      %1279 = vmatpush1.bf16.msra.mxu0 %v1232
      %1280 = vmatprep.subr.bf16.mxu0 0
      %1281 = vmatpush1.bf16.msra.mxu0 %v1233
      %1282 = vmatprep.mubr.bf16.mxu0 %v1114
      %1283 = vmatmul.mubr.bf16.gmra.mrb[0].mxu0 %v1113
      %v1284 = vpop.f32.mrb[0].mxu0
      %v1285 = vadd.f32 %v1152, %v1284
      %v1286 = vpop.f32.mrb[0].mxu0
      %v1287 = vpop.f32.mrb[0].mxu0
      %v1288 = vadd.f32 %v1152, %v1287
      %v1289 = vpop.f32.mrb[0].mxu0
      %1290 = vdwg.mxu0
      %v1291 = vld [vmem:[%s7] sm:$0x1]
      %v1292 = vxor.u32 %v1285, 2147483648
      %v1293 = vxor.u32 %v1288, 2147483648
      %v1294 = vmul.f32 %v1292, 1.442695
      %v1295 = vpow.pop %v1294
      %v1296 = vmul.f32 %v1293, 1.442695
      %v1297 = vpow.pop %v1296
      %v1298 = vadd.f32 %v1295, 1.0
      %v1299 = vadd.f32 %v1297, 1.0
      %v1300 = vrcp.pop %v1298
      %v1301 = vmul.f32 1.0, %v1300
      %v1302 = vrcp.pop %v1299
      %v1303 = vmul.f32 1.0, %v1302
      %v1304 = vsub.f32 %v1301, %v1285
      %v1305 = vsub.f32 %v1303, %v1288
      %v1307 = vlaneseq
      %v1308 = vshrl.u32 %v1307, 7
      %v1309 = vsub.s32 0, %v1308
      %v1310 = vrot.slane %v1291, %v1309
      %v1312 = vmul.f32 %v1310, %v1304
      %v1313 = vmul.f32 %v1310, %v1305
      %v1314 = vadd.f32 %v1285, %v1312
      %v1315 = vadd.f32 %v1288, %v1313
      %1316 = vst [vmem:[%s8] sm:$0xff] %v1314
      %1317 = vst [vmem:[%s8 + $0x8] sm:$0xff] %v1315
    $region53: #{particle_picker_forward.1} parent=1 // pred_fallthru
      _
    // Predicated region
    $region54: #{particle_picker_forward.1} parent=1 // pred_check
      _
    $region55: #{particle_picker_forward.1} parent=1 // pred_check_branch
      %1319 = sbr.rel (0) target = $region57
    $region56: #{particle_picker_forward.1} parent=1 // pred_region
      _
    $region57: #{particle_picker_forward.1} parent=1 // pred_fallthru
      _
    // Predicated region
    $region58: #{particle_picker_forward.1} parent=1 // pred_check
      _
    $region59: #{particle_picker_forward.1} parent=1 // pred_check_branch
      %1321 = sbr.rel (0) target = $region61
    $region60: #{particle_picker_forward.1} parent=1 // pred_region
      _
    $region61: #{particle_picker_forward.1} parent=1 // pred_fallthru
      _
    %1322 = vsyncpa [#allocation4], 1
    %1323 = vsyncpa [#allocation6], 1

</llo_original>
